<compile_context>
chip_gen: v7x
topology: tpu7x:2x2x1
jax: 0.10.0
libtpu: 0.0.40
codegen_flags: <defaults>
</compile_context>

<pallas_src>
import jax
import jax.numpy as jnp
from jax.experimental import pallas as pl
from jax.experimental.pallas import tpu as pltpu


# ------------------------------- Pallas kernel -------------------------------

def _sse_kernel(x_ref, w1_ref, b1_ref, w2_ref, b2_ref, o_ref):
    # One batch sample per grid step.
    x = x_ref[0]                                                  # (C, HW) f32
    hw = x.shape[-1]

    # Global average pool over H*W as an MXU dot against a 1/HW column
    # (keeps the cross-lane reduction off the VPU/XLU).
    pool_w = jnp.full((hw, 1), 1.0 / hw, dtype=jnp.float32)
    pooled = jnp.dot(x, pool_w, preferred_element_type=jnp.float32)  # (C, 1)

    # Squeeze: 1x1 conv == matvec, bias + ReLU fused in the epilogue.
    h = jnp.dot(w1_ref[...], pooled, preferred_element_type=jnp.float32)
    h = jnp.maximum(h + b1_ref[...], 0.0)                         # (Cr, 1)

    # Excite: 1x1 conv == matvec, bias + sigmoid fused in the epilogue.
    s = jnp.dot(w2_ref[...], h, preferred_element_type=jnp.float32)
    s = jax.nn.sigmoid(s + b2_ref[...])                           # (C, 1)

    # Shortcut: lane-dense (C, HW) elementwise store.
    o_ref[0] = x + x * s


# --------------------------------- wrapper -----------------------------------

def shortcut_squeeze_excite(x, w1, b1, w2, b2):
    """x: (N, C, H, W) NCHW.
    w1: (Cr, C, 1, 1), b1: (Cr,), w2: (C, Cr, 1, 1), b2: (C,)."""
    N, C, H, W = x.shape
    HW = H * W
    Cr = w1.shape[0]

    # Pre-layout once (hoisted out of any outer loop): flatten spatial so the
    # lane axis is HW, and drop the 1x1 conv kernels to plain matrices.
    xr = x.reshape(N, C, HW).astype(jnp.float32)
    w1m = w1.reshape(Cr, C).astype(jnp.float32)
    w2m = w2.reshape(C, Cr).astype(jnp.float32)
    b1c = b1.reshape(Cr, 1).astype(jnp.float32)
    b2c = b2.reshape(C, 1).astype(jnp.float32)

    out = pl.pallas_call(
        _sse_kernel,
        out_shape=jax.ShapeDtypeStruct((N, C, HW), jnp.float32),
        grid=(N,),
        in_specs=[
            pl.BlockSpec((1, C, HW), lambda n: (n, 0, 0)),
            pl.BlockSpec((Cr, C), lambda n: (0, 0)),
            pl.BlockSpec((Cr, 1), lambda n: (0, 0)),
            pl.BlockSpec((C, Cr), lambda n: (0, 0)),
            pl.BlockSpec((C, 1), lambda n: (0, 0)),
        ],
        out_specs=pl.BlockSpec((1, C, HW), lambda n: (n, 0, 0)),
        compiler_params=pltpu.CompilerParams(
            dimension_semantics=("parallel",)),
    )(xr, w1m, b1c, w2m, b2c)
    return out.reshape(N, C, H, W)


# ------------------------------ pure-JAX reference ----------------------------

def _reference(x, w1, b1, w2, b2):
    pooled = jnp.mean(x, axis=(2, 3))                             # (N, C)
    h = jax.nn.relu(pooled @ w1.reshape(w1.shape[0], -1).T + b1)
    s = jax.nn.sigmoid(h @ w2.reshape(w2.shape[0], -1).T + b2)
    return x + x * s[:, :, None, None]


# ----------------------------------- main -------------------------------------

if __name__ == "__main__":
    key = jax.random.PRNGKey(0)
    kx, k1, k2, k3, k4 = jax.random.split(key, 5)

    N, C, H, W = 2, 32, 16, 16          # HW = 256 -> lane-dense blocks
    Cr = C // 4                         # reduction_ratio = 4

    x = jax.random.normal(kx, (N, C, H, W), jnp.float32)
    w1 = 0.1 * jax.random.normal(k1, (Cr, C, 1, 1), jnp.float32)
    b1 = 0.05 * jax.random.normal(k2, (Cr,), jnp.float32)
    w2 = 0.1 * jax.random.normal(k3, (C, Cr, 1, 1), jnp.float32)
    b2 = 0.05 * jax.random.normal(k4, (C,), jnp.float32)

    out = shortcut_squeeze_excite(x, w1, b1, w2, b2)
    out = jax.block_until_ready(out)

    ref = _reference(x, w1, b1, w2, b2)
    assert out.shape == (N, C, H, W), out.shape
    assert bool(jnp.all(jnp.isfinite(out)))
    assert bool(jnp.allclose(out, ref, atol=1e-5, rtol=1e-5))
    print("KERNEL_OK")
</pallas_src>

<mosaic_0001>
module attributes {stable_mosaic.version = 11 : i64} {
  func.func @_sse_kernel(%arg0: i32, %arg1: memref<1x32x256xf32, #tpu.memory_space<vmem>>, %arg2: memref<8x32xf32, #tpu.memory_space<vmem>>, %arg3: memref<8x1xf32, #tpu.memory_space<vmem>>, %arg4: memref<32x8xf32, #tpu.memory_space<vmem>>, %arg5: memref<32x1xf32, #tpu.memory_space<vmem>>, %arg6: memref<1x32x256xf32, #tpu.memory_space<vmem>>) attributes {dimension_semantics = [#tpu.dimension_semantics<parallel>], iteration_bounds = array<i64: 2>, scalar_prefetch = 0 : i64, scratch_operands = 0 : i64, tpu.core_type = #tpu.core_type<tc>, window_params = [{transform_indices = @transform_0, window_bounds = array<i64: 1, 32, 256>}, {pipeline_mode = #tpu.pipeline_mode<synchronous>, transform_indices = @transform_1, window_bounds = array<i64: 8, 32>}, {pipeline_mode = #tpu.pipeline_mode<synchronous>, transform_indices = @transform_2, window_bounds = array<i64: 8, 1>}, {pipeline_mode = #tpu.pipeline_mode<synchronous>, transform_indices = @transform_3, window_bounds = array<i64: 32, 8>}, {pipeline_mode = #tpu.pipeline_mode<synchronous>, transform_indices = @transform_4, window_bounds = array<i64: 32, 1>}, {transform_indices = @transform_5, window_bounds = array<i64: 1, 32, 256>}]} {
    %c0 = arith.constant 0 : index
    %c0_0 = arith.constant 0 : index
    %c0_1 = arith.constant 0 : index
    %0 = vector.load %arg1[%c0, %c0_0, %c0_1] : memref<1x32x256xf32, #tpu.memory_space<vmem>>, vector<1x32x256xf32>
    %1 = vector.shape_cast %0 : vector<1x32x256xf32> to vector<32x256xf32>
    %cst = arith.constant 3.906250e-03 : f32
    %2 = vector.broadcast %cst : f32 to vector<256x1xf32>
    %cst_2 = arith.constant dense<0.000000e+00> : vector<32x1xf32>
    %3 = tpu.matmul %1, %2, %cst_2 {dimension_numbers = #tpu.dot_dimension_numbers<[1], [0], [0], [1], [0, 0, 1, 1], [], []>} : vector<32x256xf32>, vector<256x1xf32>, vector<32x1xf32> -> vector<32x1xf32>
    %c0_3 = arith.constant 0 : index
    %c0_4 = arith.constant 0 : index
    %4 = vector.load %arg2[%c0_3, %c0_4] : memref<8x32xf32, #tpu.memory_space<vmem>>, vector<8x32xf32>
    %cst_5 = arith.constant dense<0.000000e+00> : vector<8x1xf32>
    %5 = tpu.matmul %4, %3, %cst_5 {dimension_numbers = #tpu.dot_dimension_numbers<[1], [0], [0], [1], [0, 0, 1, 1], [], []>} : vector<8x32xf32>, vector<32x1xf32>, vector<8x1xf32> -> vector<8x1xf32>
    %c0_6 = arith.constant 0 : index
    %c0_7 = arith.constant 0 : index
    %6 = vector.load %arg3[%c0_6, %c0_7] : memref<8x1xf32, #tpu.memory_space<vmem>>, vector<8x1xf32>
    %7 = arith.addf %5, %6 : vector<8x1xf32>
    %cst_8 = arith.constant 0.000000e+00 : f32
    %8 = vector.broadcast %cst_8 : f32 to vector<8x1xf32>
    %9 = arith.maximumf %7, %8 : vector<8x1xf32>
    %c0_9 = arith.constant 0 : index
    %c0_10 = arith.constant 0 : index
    %10 = vector.load %arg4[%c0_9, %c0_10] : memref<32x8xf32, #tpu.memory_space<vmem>>, vector<32x8xf32>
    %cst_11 = arith.constant dense<0.000000e+00> : vector<32x1xf32>
    %11 = tpu.matmul %10, %9, %cst_11 {dimension_numbers = #tpu.dot_dimension_numbers<[1], [0], [0], [1], [0, 0, 1, 1], [], []>} : vector<32x8xf32>, vector<8x1xf32>, vector<32x1xf32> -> vector<32x1xf32>
    %c0_12 = arith.constant 0 : index
    %c0_13 = arith.constant 0 : index
    %12 = vector.load %arg5[%c0_12, %c0_13] : memref<32x1xf32, #tpu.memory_space<vmem>>, vector<32x1xf32>
    %13 = arith.addf %11, %12 : vector<32x1xf32>
    %14 = arith.negf %13 : vector<32x1xf32>
    %15 = math.exp %14 : vector<32x1xf32>
    %cst_14 = arith.constant 1.000000e+00 : f32
    %16 = vector.broadcast %cst_14 : f32 to vector<32x1xf32>
    %17 = arith.addf %16, %15 : vector<32x1xf32>
    %18 = arith.divf %16, %17 : vector<32x1xf32>
    %19 = vector.broadcast %18 : vector<32x1xf32> to vector<32x256xf32>
    %20 = arith.mulf %1, %19 : vector<32x256xf32>
    %21 = arith.addf %1, %20 : vector<32x256xf32>
    %c0_15 = arith.constant 0 : index
    %c0_16 = arith.constant 0 : index
    %c0_17 = arith.constant 0 : index
    %22 = vector.load %arg6[%c0_15, %c0_16, %c0_17] : memref<1x32x256xf32, #tpu.memory_space<vmem>>, vector<1x32x256xf32>
    %23 = vector.shape_cast %22 : vector<1x32x256xf32> to vector<32x256xf32>
    %24 = vector.shape_cast %21 : vector<32x256xf32> to vector<1x32x256xf32>
    tpu.vector_store %arg6[%c0_15, %c0_16, %c0_17], %24 {strides = array<i32>} : memref<1x32x256xf32, #tpu.memory_space<vmem>>, vector<1x32x256xf32>,
    return
  }
  func.func @transform_0(%arg0: i32) -> (i32, i32, i32) {
    %c0_i32 = arith.constant 0 : i32
    %c0_i32_0 = arith.constant 0 : i32
    %c0_i32_1 = arith.constant 0 : i32
    return %arg0, %c0_i32, %c0_i32_0 : i32, i32, i32
  }
  func.func @transform_1(%arg0: i32) -> (i32, i32) {
    %c0_i32 = arith.constant 0 : i32
    %c0_i32_0 = arith.constant 0 : i32
    %c0_i32_1 = arith.constant 0 : i32
    return %c0_i32, %c0_i32_0 : i32, i32
  }
  func.func @transform_2(%arg0: i32) -> (i32, i32) {
    %c0_i32 = arith.constant 0 : i32
    %c0_i32_0 = arith.constant 0 : i32
    %c0_i32_1 = arith.constant 0 : i32
    return %c0_i32, %c0_i32_0 : i32, i32
  }
  func.func @transform_3(%arg0: i32) -> (i32, i32) {
    %c0_i32 = arith.constant 0 : i32
    %c0_i32_0 = arith.constant 0 : i32
    %c0_i32_1 = arith.constant 0 : i32
    return %c0_i32, %c0_i32_0 : i32, i32
  }
  func.func @transform_4(%arg0: i32) -> (i32, i32) {
    %c0_i32 = arith.constant 0 : i32
    %c0_i32_0 = arith.constant 0 : i32
    %c0_i32_1 = arith.constant 0 : i32
    return %c0_i32, %c0_i32_0 : i32, i32
  }
  func.func @transform_5(%arg0: i32) -> (i32, i32, i32) {
    %c0_i32 = arith.constant 0 : i32
    %c0_i32_0 = arith.constant 0 : i32
    %c0_i32_1 = arith.constant 0 : i32
    return %arg0, %c0_i32, %c0_i32_0 : i32, i32, i32
  }
}

</mosaic_0001>

<llo_original>
// kernel: tpu_custom_call.1
$region0: #{tpu_custom_call.1}
  #allocation0 [shape = 'u32[]', space=smem, size = 0x4, offset = 0x4, fixed_abs, tag = 'smem constant byte address 0x4 - core index']
  #allocation1 [shape = 'u32[144,128]{1,0:T(1,128)}', space=vmem, size = 0x12000, scoped, tag = 'internal scratch']
  %s0 = inlined_call_operand.hbm [shape: f32[2,32,256], index: 0, kind: input, shape index: {}]
  %s1 = inlined_call_operand.vmem [shape: f32[8,32], index: 1, kind: input, shape index: {}]
  %s2 = inlined_call_operand.vmem [shape: f32[8,1], index: 2, kind: input, shape index: {}]
  %s3 = inlined_call_operand.vmem [shape: f32[32,8], index: 3, kind: input, shape index: {}]
  %s4 = inlined_call_operand.vmem [shape: f32[32,1], index: 4, kind: input, shape index: {}]
  %s5 = inlined_call_operand.hbm [shape: f32[2,32,256], index: 5, kind: output, shape index: {}]
  %s6 = sld [smem:[#allocation0]]
  $region57: #{tpu_custom_call.1} parent=0
    _
  %s8 = ssub.s32 1, %s6
  %s9 = scalar_select 0, %s8, %s6
  $region1: #{tpu_custom_call.1} parent=0
    #allocation2 [shape = 'u8[65536]{0}', space=vmem, size = 0x10000, scoped, tag = 'input window, operand 0']
    #allocation3 [shape = 's32[2]{0}', space=sflag, size = 0x8, scoped, tag = 'scoped memory for tpu_custom_call.1']
    #allocation4 [shape = 's32[2]{0}', space=sflag, size = 0x8, scoped, tag = 'scoped memory for tpu_custom_call.1']
    #allocation5 [shape = 'u8[65536]{0}', space=vmem, size = 0x10000, scoped, tag = 'output window, operand 0']
    %10 = vsyncpa [#allocation3], 0
    %s11 = scalar_lea.sflag [#allocation3], 1
    %12 = vsyncpa %s11, 0
    %13 = vsyncpa [#allocation4], 0
    %s14 = scalar_lea.sflag [#allocation4], 1
    %15 = vsyncpa %s14, 0
    loop: start=0, step=1, limit=4
    $region2: #{tpu_custom_call.1} parent=1 // loop_pre_header
      _
    $region3: #{tpu_custom_call.1} parent=1 // loop_header
      %s17 = sphi 0, %s21
      %p18 = scmp.ge.s32.totalorder %s17, 4
      %s27 = sphi 0, %s29
      %s30 = sphi 0, %s27
      %s31 = sphi 0, %s30
      %s47 = sphi 0, %s31
      %s51 = sphi 0, %s51
      %s53 = sphi 0, %s51
      %s54 = sphi 0, %s53
      %s68 = sphi 0, %s54
      %s72 = sphi 0, %s72
      %s74 = sphi 0, %s72
      %s75 = sphi 0, %s74
      %s89 = sphi 0, %s75
      %s93 = sphi 0, %s93
      %s95 = sphi 0, %s93
      %s96 = sphi 0, %s95
      %s110 = sphi 0, %s96
      %s114 = sphi 0, %s114
      %s116 = sphi 0, %s114
      %s117 = sphi 0, %s116
      %s131 = sphi 0, %s117
      %s137 = sphi 0, %s139
      %s140 = sphi 0, %s137
      %s141 = sphi 0, %s140
      %s157 = sphi 0, %s141
    $region4: #{tpu_custom_call.1} parent=1 // loop_header_branch
      %20 = sbr.rel (%p18) target = $region8
    $region5: #{tpu_custom_call.1} parent=1 // loop_body
      %s22 = ssub.s32 %s17, 1
      %s23 = ssub.s32 %s17, 2
      %s24 = sadd.s32 %s17, 1
      %s25 = ssub.s32 %s17, %s24
      %p26 = scmp.eq.s32.totalorder %s25, 0
      %s28 = sadd.s32 %s27, 1
      %s29 = scalar_select %p26, %s27, %s28
      %p32 = pneg %p26
      %p33 = scmp.eq.s32.totalorder %s17, 1
      %p34 = por %p32, %p33
      %p35 = scmp.ne.s32.totalorder %s27, %s30
      %p36 = scmp.eq.s32.totalorder %s17, 0
      %p37 = por %p35, %p36
      %p38 = scmp.ne.s32.totalorder %s27, %s30
      %p39 = scmp.eq.s32.totalorder %s22, 1
      %p40 = por %p38, %p39
      %p41 = scmp.ne.s32.totalorder %s30, %s31
      %p42 = scmp.eq.s32.totalorder %s22, 0
      %p43 = por %p41, %p42
      %p44 = scmp.ne.s32.totalorder %s30, %s31
      %p45 = scmp.eq.s32.totalorder %s23, 1
      %p46 = por %p44, %p45
      %p48 = scmp.ne.s32.totalorder %s31, %s47
      %p49 = scmp.eq.s32.totalorder %s23, 0
      %p50 = por %p48, %p49
      %s52 = sadd.s32 %s51, 1
      %p55 = scmp.eq.s32.totalorder %s17, 1
      %p56 = scmp.ne.s32.totalorder %s51, %s53
      %p57 = scmp.eq.s32.totalorder %s17, 0
      %p58 = por %p56, %p57
      %p59 = scmp.ne.s32.totalorder %s51, %s53
      %p60 = scmp.eq.s32.totalorder %s22, 1
      %p61 = por %p59, %p60
      %p62 = scmp.ne.s32.totalorder %s53, %s54
      %p63 = scmp.eq.s32.totalorder %s22, 0
      %p64 = por %p62, %p63
      %p65 = scmp.ne.s32.totalorder %s53, %s54
      %p66 = scmp.eq.s32.totalorder %s23, 1
      %p67 = por %p65, %p66
      %p69 = scmp.ne.s32.totalorder %s54, %s68
      %p70 = scmp.eq.s32.totalorder %s23, 0
      %p71 = por %p69, %p70
      %s73 = sadd.s32 %s72, 1
      %p76 = scmp.eq.s32.totalorder %s17, 1
      %p77 = scmp.ne.s32.totalorder %s72, %s74
      %p78 = scmp.eq.s32.totalorder %s17, 0
      %p79 = por %p77, %p78
      %p80 = scmp.ne.s32.totalorder %s72, %s74
      %p81 = scmp.eq.s32.totalorder %s22, 1
      %p82 = por %p80, %p81
      %p83 = scmp.ne.s32.totalorder %s74, %s75
      %p84 = scmp.eq.s32.totalorder %s22, 0
      %p85 = por %p83, %p84
      %p86 = scmp.ne.s32.totalorder %s74, %s75
      %p87 = scmp.eq.s32.totalorder %s23, 1
      %p88 = por %p86, %p87
      %p90 = scmp.ne.s32.totalorder %s75, %s89
      %p91 = scmp.eq.s32.totalorder %s23, 0
      %p92 = por %p90, %p91
      %s94 = sadd.s32 %s93, 1
      %p97 = scmp.eq.s32.totalorder %s17, 1
      %p98 = scmp.ne.s32.totalorder %s93, %s95
      %p99 = scmp.eq.s32.totalorder %s17, 0
      %p100 = por %p98, %p99
      %p101 = scmp.ne.s32.totalorder %s93, %s95
      %p102 = scmp.eq.s32.totalorder %s22, 1
      %p103 = por %p101, %p102
      %p104 = scmp.ne.s32.totalorder %s95, %s96
      %p105 = scmp.eq.s32.totalorder %s22, 0
      %p106 = por %p104, %p105
      %p107 = scmp.ne.s32.totalorder %s95, %s96
      %p108 = scmp.eq.s32.totalorder %s23, 1
      %p109 = por %p107, %p108
      %p111 = scmp.ne.s32.totalorder %s96, %s110
      %p112 = scmp.eq.s32.totalorder %s23, 0
      %p113 = por %p111, %p112
      %s115 = sadd.s32 %s114, 1
      %p118 = scmp.eq.s32.totalorder %s17, 1
      %p119 = scmp.ne.s32.totalorder %s114, %s116
      %p120 = scmp.eq.s32.totalorder %s17, 0
      %p121 = por %p119, %p120
      %p122 = scmp.ne.s32.totalorder %s114, %s116
      %p123 = scmp.eq.s32.totalorder %s22, 1
      %p124 = por %p122, %p123
      %p125 = scmp.ne.s32.totalorder %s116, %s117
      %p126 = scmp.eq.s32.totalorder %s22, 0
      %p127 = por %p125, %p126
      %p128 = scmp.ne.s32.totalorder %s116, %s117
      %p129 = scmp.eq.s32.totalorder %s23, 1
      %p130 = por %p128, %p129
      %p132 = scmp.ne.s32.totalorder %s117, %s131
      %p133 = scmp.eq.s32.totalorder %s23, 0
      %p134 = por %p132, %p133
      %s135 = ssub.s32 %s17, %s24
      %p136 = scmp.eq.s32.totalorder %s135, 0
      %s138 = sadd.s32 %s137, 1
      %s139 = scalar_select %p136, %s137, %s138
      %p142 = pneg %p136
      %p143 = scmp.eq.s32.totalorder %s17, 1
      %p144 = por %p142, %p143
      %p145 = scmp.ne.s32.totalorder %s137, %s140
      %p146 = scmp.eq.s32.totalorder %s17, 0
      %p147 = por %p145, %p146
      %p148 = scmp.ne.s32.totalorder %s137, %s140
      %p149 = scmp.eq.s32.totalorder %s22, 1
      %p150 = por %p148, %p149
      %p151 = scmp.ne.s32.totalorder %s140, %s141
      %p152 = scmp.eq.s32.totalorder %s22, 0
      %p153 = por %p151, %p152
      %p154 = scmp.ne.s32.totalorder %s140, %s141
      %p155 = scmp.eq.s32.totalorder %s23, 1
      %p156 = por %p154, %p155
      %p158 = scmp.ne.s32.totalorder %s141, %s157
      %p159 = scmp.eq.s32.totalorder %s23, 0
      %p160 = por %p158, %p159
      %p161 = scmp.le.s32.totalorder 1, %s17
      %p162 = scmp.lt.s32.totalorder %s17, 3
      %p163 = pnand %p161, %p162
      %p164 = pneg %p163
      // Predicated region
      $region9: #{tpu_custom_call.1} parent=5 // pred_check
        _
      $region10: #{tpu_custom_call.1} parent=5 // pred_check_branch
        %166 = sbr.rel (%p163) target = $region12
      $region11: #{tpu_custom_call.1} parent=5 // pred_region
        %s167 = ssub.s32 %s17, 1
        // Predicated region
        $region13: #{tpu_custom_call.1} parent=11 // pred_check
          %p168 = pneg %p64
        $region14: #{tpu_custom_call.1} parent=11 // pred_check_branch
          %170 = sbr.rel (%p168) target = $region16
        $region15: #{tpu_custom_call.1} parent=11 // pred_region
          _
        $region16: #{tpu_custom_call.1} parent=11 // pred_fallthru
          _
        // Predicated region
        $region17: #{tpu_custom_call.1} parent=11 // pred_check
          %p171 = pneg %p85
        $region18: #{tpu_custom_call.1} parent=11 // pred_check_branch
          %173 = sbr.rel (%p171) target = $region20
        $region19: #{tpu_custom_call.1} parent=11 // pred_region
          _
        $region20: #{tpu_custom_call.1} parent=11 // pred_fallthru
          _
        // Predicated region
        $region21: #{tpu_custom_call.1} parent=11 // pred_check
          %p174 = pneg %p106
        $region22: #{tpu_custom_call.1} parent=11 // pred_check_branch
          %176 = sbr.rel (%p174) target = $region24
        $region23: #{tpu_custom_call.1} parent=11 // pred_region
          _
        $region24: #{tpu_custom_call.1} parent=11 // pred_fallthru
          _
        // Predicated region
        $region25: #{tpu_custom_call.1} parent=11 // pred_check
          %p177 = pneg %p127
        $region26: #{tpu_custom_call.1} parent=11 // pred_check_branch
          %179 = sbr.rel (%p177) target = $region28
        $region27: #{tpu_custom_call.1} parent=11 // pred_region
          _
        $region28: #{tpu_custom_call.1} parent=11 // pred_fallthru
          _
      $region12: #{tpu_custom_call.1} parent=5 // pred_fallthru
        _
      %p180 = scmp.lt.s32.totalorder %s17, 2
      // Predicated region
      $region29: #{tpu_custom_call.1} parent=5 // pred_check
        %p181 = pneg %p180
      $region30: #{tpu_custom_call.1} parent=5 // pred_check_branch
        %183 = sbr.rel (%p181) target = $region32
      $region31: #{tpu_custom_call.1} parent=5 // pred_region
        // Predicated region
        $region33: #{tpu_custom_call.1} parent=31 // pred_check
          %p184 = pneg %p37
        $region34: #{tpu_custom_call.1} parent=31 // pred_check_branch
          %186 = sbr.rel (%p184) target = $region36
        $region35: #{tpu_custom_call.1} parent=31 // pred_region
          %s187 = sand.u32 %s27, 1
          %s188 = scalar_lea.sflag [#allocation3], %s187
          %s189 = sand.u32 %s27, 1
          %s190 = smul.addr %s189, 64
          %s191 = scalar_lea.vmem [#allocation2], %s190
          %s193 = ssub.s32 1024, 1024
          %194 = vsyncadd %s188, %s193
          %s195 = smul.addr %s17, 8
          %s196 = smul.addr %s195, 128
          %s197 = scalar_lea.hbm %s0, %s196
          %s198 = sshll.u32 %s191, 4
          %s199 = int_to_ptr.vmem [resolvable:$true] %s198
          %204 = dma.hbm_to_vmem [thread:$0]  %s197, 1024, %s199, %s188, 256, 256, 16
        $region36: #{tpu_custom_call.1} parent=31 // pred_fallthru
          _
      $region32: #{tpu_custom_call.1} parent=5 // pred_fallthru
        _
      %p205 = scmp.le.s32.totalorder 1, %s17
      %p206 = scmp.lt.s32.totalorder %s17, 3
      %p207 = pnand %p205, %p206
      %p208 = pneg %p207
      // Predicated region
      $region37: #{tpu_custom_call.1} parent=5 // pred_check
        _
      $region38: #{tpu_custom_call.1} parent=5 // pred_check_branch
        %210 = sbr.rel (%p207) target = $region40
      $region39: #{tpu_custom_call.1} parent=5 // pred_region
        %s211 = ssub.s32 %s17, 1
        %s212 = sand.u32 %s30, 1
        %s213 = scalar_lea.sflag [#allocation3], %s212
        %s214 = sand.u32 %s30, 1
        %s215 = smul.addr %s214, 64
        %s216 = scalar_lea.vmem [#allocation2], %s215
        // Predicated region
        $region41: #{tpu_custom_call.1} parent=39 // pred_check
          %p217 = pneg %p43
        $region42: #{tpu_custom_call.1} parent=39 // pred_check_branch
          %219 = sbr.rel (%p217) target = $region44
        $region43: #{tpu_custom_call.1} parent=39 // pred_region
          %220 = dma.done %s213, 1024
        $region44: #{tpu_custom_call.1} parent=39 // pred_fallthru
          _
        %s221 = sand.u32 %s30, 1
        %s222 = scalar_lea.sflag [#allocation3], %s221
        %s223 = sand.u32 %s30, 1
        %s224 = smul.addr %s223, 64
        %s225 = scalar_lea.vmem [#allocation2], %s224
        %p226 = pneg %p43
        %p227 = pneg %p40
        %p228 = pneg %p64
        %p229 = pneg %p61
        %p230 = pneg %p85
        %p231 = pneg %p82
        %p232 = pneg %p106
        %p233 = pneg %p103
        %p234 = pneg %p127
        %p235 = pneg %p124
        %p236 = pneg %p153
        %p237 = pneg %p150
        %s238 = sand.u32 %s140, 1
        %s239 = scalar_lea.sflag [#allocation4], %s238
        %s240 = sand.u32 %s140, 1
        %s241 = smul.addr %s240, 64
        %s242 = scalar_lea.vmem [#allocation5], %s241
        %v243 = vld [vmem:[%s216] sm:$0xff]
        %v244 = vld [vmem:[%s216 + $0x8] sm:$0xff]
        %v245 = vld [vmem:[%s216 + $0x10] sm:$0xff]
        %v246 = vld [vmem:[%s216 + $0x18] sm:$0xff]
        %v247 = vld [vmem:[%s216 + $0x20] sm:$0xff]
        %v248 = vld [vmem:[%s216 + $0x28] sm:$0xff]
        %v249 = vld [vmem:[%s216 + $0x30] sm:$0xff]
        %v250 = vld [vmem:[%s216 + $0x38] sm:$0xff]
        %251 = vmatprep.subr.mxu0 0.0
        %252 = vmatpush1.msra.mxu0 0.00390625
        %253 = vmatprep.subr.mxu0 0.0
        %254 = vmatpush1.msra.mxu0 0.00390625
        %255 = vmatprep.subr.mxu0 0.0
        %256 = vmatpush1.msra.mxu0 0.00390625
        %257 = vmatprep.subr.mxu0 0.0
        %258 = vmatpush1.msra.mxu0 0.00390625
        %259 = vmatprep.subr.mxu0 0.0
        %260 = vmatpush1.msra.mxu0 0.00390625
        %261 = vmatprep.subr.mxu0 0.0
        %262 = vmatpush1.msra.mxu0 0.00390625
        %263 = vmatprep.subr.mxu0 0.0
        %264 = vmatpush1.msra.mxu0 0.00390625
        %265 = vmatprep.subr.mxu0 0.0
        %266 = vmatpush1.msra.mxu0 0.00390625
        %267 = vmatprep.subr.mxu0 0.0
        %268 = vmatpush1.msra.mxu0 0.00390625
        %269 = vmatprep.subr.mxu0 0.0
        %270 = vmatpush1.msra.mxu0 0.00390625
        %271 = vmatprep.subr.mxu0 0.0
        %272 = vmatpush1.msra.mxu0 0.00390625
        %273 = vmatprep.subr.mxu0 0.0
        %274 = vmatpush1.msra.mxu0 0.00390625
        %275 = vmatprep.subr.mxu0 0.0
        %276 = vmatpush1.msra.mxu0 0.00390625
        %277 = vmatprep.subr.mxu0 0.0
        %278 = vmatpush1.msra.mxu0 0.00390625
        %279 = vmatprep.subr.mxu0 0.0
        %280 = vmatpush1.msra.mxu0 0.00390625
        %281 = vmatprep.subr.mxu0 0.0
        %282 = vmatpush1.msra.mxu0 0.00390625
        %283 = vmatprep.subr.mxu0 0.0
        %284 = vmatpush1.msra.mxu0 0.00390625
        %285 = vmatprep.subr.mxu0 0.0
        %286 = vmatpush1.msra.mxu0 0.00390625
        %287 = vmatprep.subr.mxu0 0.0
        %288 = vmatpush1.msra.mxu0 0.00390625
        %289 = vmatprep.subr.mxu0 0.0
        %290 = vmatpush1.msra.mxu0 0.00390625
        %291 = vmatprep.subr.mxu0 0.0
        %292 = vmatpush1.msra.mxu0 0.00390625
        %293 = vmatprep.subr.mxu0 0.0
        %294 = vmatpush1.msra.mxu0 0.00390625
        %295 = vmatprep.subr.mxu0 0.0
        %296 = vmatpush1.msra.mxu0 0.00390625
        %297 = vmatprep.subr.mxu0 0.0
        %298 = vmatpush1.msra.mxu0 0.00390625
        %299 = vmatprep.subr.mxu0 0.0
        %300 = vmatpush1.msra.mxu0 0.00390625
        %301 = vmatprep.subr.mxu0 0.0
        %302 = vmatpush1.msra.mxu0 0.00390625
        %303 = vmatprep.subr.mxu0 0.0
        %304 = vmatpush1.msra.mxu0 0.00390625
        %305 = vmatprep.subr.mxu0 0.0
        %306 = vmatpush1.msra.mxu0 0.00390625
        %307 = vmatprep.subr.mxu0 0.0
        %308 = vmatpush1.msra.mxu0 0.00390625
        %309 = vmatprep.subr.mxu0 0.0
        %310 = vmatpush1.msra.mxu0 0.00390625
        %311 = vmatprep.subr.mxu0 0.0
        %312 = vmatpush1.msra.mxu0 0.00390625
        %313 = vmatprep.subr.mxu0 0.0
        %314 = vmatpush1.msra.mxu0 0.00390625
        %315 = vmatprep.mubr.f32.mxu0 %v244
        %316 = vmatmul.mubr.f32.gmra.mrb[0].mxu0 %v243
        %v317 = vpop.f32.mrb[0].mxu0
        %v318 = vadd.f32 0.0, %v317
        %v319 = vpop.f32.mrb[0].mxu0
        %320 = vmatprep.mubr.f32.mxu0 %v246
        %321 = vmatmul.mubr.f32.gmra.mrb[0].mxu0 %v245
        %v322 = vpop.f32.mrb[0].mxu0
        %v323 = vadd.f32 0.0, %v322
        %v324 = vpop.f32.mrb[0].mxu0
        %325 = vmatprep.mubr.f32.mxu0 %v248
        %326 = vmatmul.mubr.f32.gmra.mrb[0].mxu0 %v247
        %v327 = vpop.f32.mrb[0].mxu0
        %v328 = vadd.f32 0.0, %v327
        %v329 = vpop.f32.mrb[0].mxu0
        %330 = vmatprep.mubr.f32.mxu0 %v250
        %331 = vmatmul.mubr.f32.gmra.mrb[0].mxu0 %v249
        %v332 = vpop.f32.mrb[0].mxu0
        %v333 = vadd.f32 0.0, %v332
        %v334 = vpop.f32.mrb[0].mxu0
        %335 = vdwg.mxu0
        %v336 = vld [vmem:[%s1] sm:$0xff]
        %v337 = vld [vmem:[%s2] sm:$0xff]
        %vm338 = vcmask 261120
        %v340 = vsel %vm338, %v336, 0
        %342 = vmatprep.subr.mxu0 0.0
        %343 = vmatpush1.msra.mxu0 %v318
        %344 = vmatprep.subr.mxu0 0.0
        %345 = vmatpush1.msra.mxu0 %v323
        %346 = vmatprep.subr.mxu0 0.0
        %347 = vmatpush1.msra.mxu0 %v328
        %348 = vmatprep.subr.mxu0 0.0
        %349 = vmatpush1.msra.mxu0 %v333
        %350 = vmatprep.subr.mxu0 0.0
        %351 = vmatpush1.msra.mxu0 0.0
        %352 = vmatprep.subr.mxu0 0.0
        %353 = vmatpush1.msra.mxu0 0.0
        %354 = vmatprep.subr.mxu0 0.0
        %355 = vmatpush1.msra.mxu0 0.0
        %356 = vmatprep.subr.mxu0 0.0
        %357 = vmatpush1.msra.mxu0 0.0
        %358 = vmatprep.subr.mxu0 0.0
        %359 = vmatpush1.msra.mxu0 0.0
        %360 = vmatprep.subr.mxu0 0.0
        %361 = vmatpush1.msra.mxu0 0.0
        %362 = vmatprep.subr.mxu0 0.0
        %363 = vmatpush1.msra.mxu0 0.0
        %364 = vmatprep.subr.mxu0 0.0
        %365 = vmatpush1.msra.mxu0 0.0
        %366 = vmatprep.subr.mxu0 0.0
        %367 = vmatpush1.msra.mxu0 0.0
        %368 = vmatprep.subr.mxu0 0.0
        %369 = vmatpush1.msra.mxu0 0.0
        %370 = vmatprep.subr.mxu0 0.0
        %371 = vmatpush1.msra.mxu0 0.0
        %372 = vmatprep.subr.mxu0 0.0
        %373 = vmatpush1.msra.mxu0 0.0
        %374 = vmatprep.subr.mxu0 0.0
        %375 = vmatpush1.msra.mxu0 0.0
        %376 = vmatprep.subr.mxu0 0.0
        %377 = vmatpush1.msra.mxu0 0.0
        %378 = vmatprep.subr.mxu0 0.0
        %379 = vmatpush1.msra.mxu0 0.0
        %380 = vmatprep.subr.mxu0 0.0
        %381 = vmatpush1.msra.mxu0 0.0
        %382 = vmatprep.subr.mxu0 0.0
        %383 = vmatpush1.msra.mxu0 0.0
        %384 = vmatprep.subr.mxu0 0.0
        %385 = vmatpush1.msra.mxu0 0.0
        %386 = vmatprep.subr.mxu0 0.0
        %387 = vmatpush1.msra.mxu0 0.0
        %388 = vmatprep.subr.mxu0 0.0
        %389 = vmatpush1.msra.mxu0 0.0
        %390 = vmatprep.subr.mxu0 0.0
        %391 = vmatpush1.msra.mxu0 0.0
        %392 = vmatprep.subr.mxu0 0.0
        %393 = vmatpush1.msra.mxu0 0.0
        %394 = vmatprep.subr.mxu0 0.0
        %395 = vmatpush1.msra.mxu0 0.0
        %396 = vmatprep.subr.mxu0 0.0
        %397 = vmatpush1.msra.mxu0 0.0
        %398 = vmatprep.subr.mxu0 0.0
        %399 = vmatpush1.msra.mxu0 0.0
        %400 = vmatprep.subr.mxu0 0.0
        %401 = vmatpush1.msra.mxu0 0.0
        %402 = vmatprep.subr.mxu0 0.0
        %403 = vmatpush1.msra.mxu0 0.0
        %404 = vmatprep.subr.mxu0 0.0
        %405 = vmatpush1.msra.mxu0 0.0
        %406 = vmatprep.mubr.f32.mxu0 0.0
        %407 = vmatmul.mubr.f32.gmra.mrb[0].mxu0 %v340
        %v408 = vpop.f32.mrb[0].mxu0
        %v409 = vadd.f32 %v337, %v408
        %v410 = vpop.f32.mrb[0].mxu0
        %411 = vdwg.mxu0
        %v412 = vmax.f32 %v409, 0.0
        %v413 = vld [vmem:[%s3] sm:$0xff]
        %v414 = vld [vmem:[%s3 + $0x8] sm:$0xff]
        %v415 = vld [vmem:[%s3 + $0x10] sm:$0xff]
        %v416 = vld [vmem:[%s3 + $0x18] sm:$0xff]
        %v417 = vld [vmem:[%s4] sm:$0xff]
        %v418 = vld [vmem:[%s4 + $0x8] sm:$0xff]
        %v419 = vld [vmem:[%s4 + $0x10] sm:$0xff]
        %v420 = vld [vmem:[%s4 + $0x18] sm:$0xff]
        %vm421 = vcmask 64512
        %v423 = vsel %vm421, %v413, 0
        %v426 = vsel %vm421, %v414, 0
        %v429 = vsel %vm421, %v415, 0
        %v432 = vsel %vm421, %v416, 0
        %434 = vmatprep.subr.mxu0 0.0
        %435 = vmatpush1.msra.mxu0 %v412
        %436 = vmatprep.subr.mxu0 0.0
        %437 = vmatpush1.msra.mxu0 0.0
        %438 = vmatprep.subr.mxu0 0.0
        %439 = vmatpush1.msra.mxu0 0.0
        %440 = vmatprep.subr.mxu0 0.0
        %441 = vmatpush1.msra.mxu0 0.0
        %442 = vmatprep.subr.mxu0 0.0
        %443 = vmatpush1.msra.mxu0 0.0
        %444 = vmatprep.subr.mxu0 0.0
        %445 = vmatpush1.msra.mxu0 0.0
        %446 = vmatprep.subr.mxu0 0.0
        %447 = vmatpush1.msra.mxu0 0.0
        %448 = vmatprep.subr.mxu0 0.0
        %449 = vmatpush1.msra.mxu0 0.0
        %450 = vmatprep.subr.mxu0 0.0
        %451 = vmatpush1.msra.mxu0 0.0
        %452 = vmatprep.subr.mxu0 0.0
        %453 = vmatpush1.msra.mxu0 0.0
        %454 = vmatprep.subr.mxu0 0.0
        %455 = vmatpush1.msra.mxu0 0.0
        %456 = vmatprep.subr.mxu0 0.0
        %457 = vmatpush1.msra.mxu0 0.0
        %458 = vmatprep.subr.mxu0 0.0
        %459 = vmatpush1.msra.mxu0 0.0
        %460 = vmatprep.subr.mxu0 0.0
        %461 = vmatpush1.msra.mxu0 0.0
        %462 = vmatprep.subr.mxu0 0.0
        %463 = vmatpush1.msra.mxu0 0.0
        %464 = vmatprep.subr.mxu0 0.0
        %465 = vmatpush1.msra.mxu0 0.0
        %466 = vmatprep.subr.mxu0 0.0
        %467 = vmatpush1.msra.mxu0 0.0
        %468 = vmatprep.subr.mxu0 0.0
        %469 = vmatpush1.msra.mxu0 0.0
        %470 = vmatprep.subr.mxu0 0.0
        %471 = vmatpush1.msra.mxu0 0.0
        %472 = vmatprep.subr.mxu0 0.0
        %473 = vmatpush1.msra.mxu0 0.0
        %474 = vmatprep.subr.mxu0 0.0
        %475 = vmatpush1.msra.mxu0 0.0
        %476 = vmatprep.subr.mxu0 0.0
        %477 = vmatpush1.msra.mxu0 0.0
        %478 = vmatprep.subr.mxu0 0.0
        %479 = vmatpush1.msra.mxu0 0.0
        %480 = vmatprep.subr.mxu0 0.0
        %481 = vmatpush1.msra.mxu0 0.0
        %482 = vmatprep.subr.mxu0 0.0
        %483 = vmatpush1.msra.mxu0 0.0
        %484 = vmatprep.subr.mxu0 0.0
        %485 = vmatpush1.msra.mxu0 0.0
        %486 = vmatprep.subr.mxu0 0.0
        %487 = vmatpush1.msra.mxu0 0.0
        %488 = vmatprep.subr.mxu0 0.0
        %489 = vmatpush1.msra.mxu0 0.0
        %490 = vmatprep.subr.mxu0 0.0
        %491 = vmatpush1.msra.mxu0 0.0
        %492 = vmatprep.subr.mxu0 0.0
        %493 = vmatpush1.msra.mxu0 0.0
        %494 = vmatprep.subr.mxu0 0.0
        %495 = vmatpush1.msra.mxu0 0.0
        %496 = vmatprep.subr.mxu0 0.0
        %497 = vmatpush1.msra.mxu0 0.0
        %498 = vmatprep.mubr.f32.mxu0 0.0
        %499 = vmatmul.mubr.f32.gmra.mrb[0].mxu0 %v423
        %v500 = vpop.f32.mrb[0].mxu0
        %v501 = vadd.f32 %v417, %v500
        %v502 = vpop.f32.mrb[0].mxu0
        %503 = vmatprep.mubr.f32.mxu0 0.0
        %504 = vmatmul.mubr.f32.gmra.mrb[0].mxu0 %v426
        %v505 = vpop.f32.mrb[0].mxu0
        %v506 = vadd.f32 %v418, %v505
        %v507 = vpop.f32.mrb[0].mxu0
        %508 = vmatprep.mubr.f32.mxu0 0.0
        %509 = vmatmul.mubr.f32.gmra.mrb[0].mxu0 %v429
        %v510 = vpop.f32.mrb[0].mxu0
        %v511 = vadd.f32 %v419, %v510
        %v512 = vpop.f32.mrb[0].mxu0
        %513 = vmatprep.mubr.f32.mxu0 0.0
        %514 = vmatmul.mubr.f32.gmra.mrb[0].mxu0 %v432
        %v515 = vpop.f32.mrb[0].mxu0
        %v516 = vadd.f32 %v420, %v515
        %v517 = vpop.f32.mrb[0].mxu0
        %518 = vdwg.mxu0
        %v519 = vxor.u32 %v501, 2147483648
        %v520 = vxor.u32 %v506, 2147483648
        %v521 = vxor.u32 %v511, 2147483648
        %v522 = vxor.u32 %v516, 2147483648
        %v523 = vmul.f32 %v519, 1.442695
        %v524 = vpow.pop %v523
        %v525 = vmul.f32 %v520, 1.442695
        %v526 = vpow.pop %v525
        %v527 = vmul.f32 %v521, 1.442695
        %v528 = vpow.pop %v527
        %v529 = vmul.f32 %v522, 1.442695
        %v530 = vpow.pop %v529
        %v531 = vadd.f32 %v524, 1.0
        %v532 = vadd.f32 %v526, 1.0
        %v533 = vadd.f32 %v528, 1.0
        %v534 = vadd.f32 %v530, 1.0
        %v535 = vrcp.pop %v531
        %v536 = vmul.f32 1.0, %v535
        %v537 = vrcp.pop %v532
        %v538 = vmul.f32 1.0, %v537
        %v539 = vrcp.pop %v533
        %v540 = vmul.f32 1.0, %v539
        %v541 = vrcp.pop %v534
        %v542 = vmul.f32 1.0, %v541
        %544 = vset.pattern.permute.xlu0 0
        %545 = vperm.xlu0 %544, %v536
        %v546 = vpop.permute.xlu0 %545
        %549 = vset.pattern.permute.xlu0 0
        %550 = vperm.xlu0 %549, %v538
        %v551 = vpop.permute.xlu0 %550
        %554 = vset.pattern.permute.xlu0 0
        %555 = vperm.xlu0 %554, %v540
        %v556 = vpop.permute.xlu0 %555
        %559 = vset.pattern.permute.xlu0 0
        %560 = vperm.xlu0 %559, %v542
        %v561 = vpop.permute.xlu0 %560
        %v563 = vmul.f32 %v243, %v546
        %v564 = vmul.f32 %v244, %v546
        %v565 = vmul.f32 %v245, %v551
        %v566 = vmul.f32 %v246, %v551
        %v567 = vmul.f32 %v247, %v556
        %v568 = vmul.f32 %v248, %v556
        %v569 = vmul.f32 %v249, %v561
        %v570 = vmul.f32 %v250, %v561
        %v571 = vadd.f32 %v243, %v563
        %v572 = vadd.f32 %v244, %v564
        %v573 = vadd.f32 %v245, %v565
        %v574 = vadd.f32 %v246, %v566
        %v575 = vadd.f32 %v247, %v567
        %v576 = vadd.f32 %v248, %v568
        %v577 = vadd.f32 %v249, %v569
        %v578 = vadd.f32 %v250, %v570
        %579 = vst [vmem:[%s242] sm:$0xff] %v571
        %580 = vst [vmem:[%s242 + $0x8] sm:$0xff] %v572
        %581 = vst [vmem:[%s242 + $0x10] sm:$0xff] %v573
        %582 = vst [vmem:[%s242 + $0x18] sm:$0xff] %v574
        %583 = vst [vmem:[%s242 + $0x20] sm:$0xff] %v575
        %584 = vst [vmem:[%s242 + $0x28] sm:$0xff] %v576
        %585 = vst [vmem:[%s242 + $0x30] sm:$0xff] %v577
        %586 = vst [vmem:[%s242 + $0x38] sm:$0xff] %v578
        %s587 = sand.u32 %s140, 1
        %s588 = scalar_lea.sflag [#allocation4], %s587
        %s589 = sand.u32 %s140, 1
        %s590 = smul.addr %s589, 64
        %s591 = scalar_lea.vmem [#allocation5], %s590
        // Predicated region
        $region45: #{tpu_custom_call.1} parent=39 // pred_check
          %p592 = pneg %p150
        $region46: #{tpu_custom_call.1} parent=39 // pred_check_branch
          %594 = sbr.rel (%p592) target = $region48
        $region47: #{tpu_custom_call.1} parent=39 // pred_region
          %s596 = ssub.s32 1024, 1024
          %597 = vsyncadd %s588, %s596
          %s598 = smul.addr %s22, 8
          %s599 = smul.addr %s598, 128
          %s600 = scalar_lea.hbm %s5, %s599
          %s601 = sshll.u32 %s591, 4
          %s602 = int_to_ptr.vmem [resolvable:$true] %s601
          %607 = dma.vmem_to_hbm [thread:$0]  %s602, 1024, %s600, %s588, 256, 256, 16
        $region48: #{tpu_custom_call.1} parent=39 // pred_fallthru
          _
      $region40: #{tpu_custom_call.1} parent=5 // pred_fallthru
        _
      %p608 = scmp.le.s32.totalorder 2, %s17
      // Predicated region
      $region49: #{tpu_custom_call.1} parent=5 // pred_check
        %p609 = pneg %p608
      $region50: #{tpu_custom_call.1} parent=5 // pred_check_branch
        %611 = sbr.rel (%p609) target = $region52
      $region51: #{tpu_custom_call.1} parent=5 // pred_region
        %s612 = ssub.s32 %s17, 2
        // Predicated region
        $region53: #{tpu_custom_call.1} parent=51 // pred_check
          %p613 = pneg %p156
        $region54: #{tpu_custom_call.1} parent=51 // pred_check_branch
          %615 = sbr.rel (%p613) target = $region56
        $region55: #{tpu_custom_call.1} parent=51 // pred_region
          %s616 = sand.u32 %s141, 1
          %s617 = scalar_lea.sflag [#allocation4], %s616
          %s618 = sand.u32 %s141, 1
          %s619 = smul.addr %s618, 64
          %s620 = scalar_lea.vmem [#allocation5], %s619
          %621 = dma.done %s617, 1024
        $region56: #{tpu_custom_call.1} parent=51 // pred_fallthru
          _
      $region52: #{tpu_custom_call.1} parent=5 // pred_fallthru
        _
    $region6: #{tpu_custom_call.1} parent=1 // loop_footer
      %s21 = sadd.s32 1, %s17
    $region7: #{tpu_custom_call.1} parent=1 // loop_footer_branch
      %16 = sbr.rel target = $region3
    $region8: #{tpu_custom_call.1} parent=1 // loop_exit
      _
    %622 = vsyncpa [#allocation3], 1
    %s623 = scalar_lea.sflag [#allocation3], 1
    %624 = vsyncpa %s623, 1
    %625 = vsyncpa [#allocation4], 1
    %s626 = scalar_lea.sflag [#allocation4], 1
    %627 = vsyncpa %s626, 1

</llo_original>
